<compile_context>
chip_gen: v5e
topology: v5e:2x2
jax: 0.10.0
libtpu: 0.0.40
codegen_flags: <defaults>
</compile_context>

<pallas_src>
import math
import numpy as np
import jax
import jax.numpy as jnp
from jax.experimental import pallas as pl
from jax.experimental.pallas import tpu as pltpu

SUB = 8  # sublane replication of y_rel so the MXU LHS is a clean 8-row tile


def _round_up(n, m):
    return ((n + m - 1) // m) * m


def _pick_tile(n, cands=(2048, 1024, 512, 256, 128), min_blocks=1):
    """Largest candidate that divides n and leaves at least `min_blocks` blocks."""
    for c in cands:
        if n % c == 0 and n // c >= min_blocks:
            return c
    return n


# ------------------------------ fused kernel ------------------------------- #
def _sag_score_kernel(xk_ref, xj_ref, wrel_ref, wroot_ref, b_ref, adjT_ref,
                      score_ref, acc_ref):
    # grid = (j: dst blocks ["parallel"], k: src blocks ["arbitrary" reduction])
    k = pl.program_id(1)

    @pl.when(k == 0)
    def _():
        acc_ref[...] = jnp.zeros_like(acc_ref)

    # y_rel for this src tile: VPU broadcast-multiply + sublane reduce over C
    # (fused here -> no separate projection kernel, no HBM round trip).
    yk = jnp.sum(xk_ref[...] * wrel_ref[...], axis=0, keepdims=True)          # [1, tk] f32
    yk_b = jnp.broadcast_to(yk.astype(jnp.bfloat16), (SUB, yk.shape[1]))      # [SUB, tk] bf16

    # adjT tile streamed as int8; cast in-register to bf16 -> native MXU bf16 path,
    # no f32 tile copy materialized.
    a = adjT_ref[...].astype(jnp.bfloat16)                                    # [tk, tn]
    acc_ref[...] += jnp.dot(yk_b, a, preferred_element_type=jnp.float32)      # [SUB, tn] f32

    @pl.when(k == pl.num_programs(1) - 1)
    def _():
        # y_root for the dst tile (only needed once per j block).
        yroot = jnp.sum(xj_ref[...] * wroot_ref[...], axis=0, keepdims=True)  # [1, tn]
        s = acc_ref[0:1, :] + yroot + b_ref[0, 0]
        score_ref[...] = jnp.tanh(s)                                          # lane-dense store


# ------------------------------ kernel wrapper ------------------------------ #
def sag_scores_pallas(adjT, xT, w_rel, w_root, b_rel):
    """adjT: [Np, Np] int8, adjT[src, dst] = edge multiplicity (zero padded).
       xT:   [C, Np]  f32 (zero padded, nodes on lanes).
       Returns scores of shape [1, Np]."""
    C, Np = xT.shape
    assert adjT.shape == (Np, Np) and adjT.dtype == jnp.int8

    w_rel = jnp.asarray(w_rel, jnp.float32).reshape(C, 1)
    w_root = jnp.asarray(w_root, jnp.float32).reshape(C, 1)
    b2d = jnp.asarray(b_rel, jnp.float32).reshape(1, 1)

    tk = _pick_tile(Np)                  # src (reduction) tile
    tn = _pick_tile(Np, min_blocks=2)    # dst tile: >=2 "parallel" blocks when Np >= 256
    grid = (Np // tn, Np // tk)

    cost = pl.CostEstimate(
        flops=2 * SUB * Np * Np + 4 * C * Np * (Np // tn),
        transcendentals=Np,
        bytes_accessed=Np * Np + (Np // tn) * C * Np * 4 + C * Np * 4 + Np * 4,
    )

    # TODO(synk): consider pipeline_mode=pl.Buffered(3) on the adjT spec for v7x once the
    # per-tile compute is confirmed to expose DMA issue latency there.
    score = pl.pallas_call(
        _sag_score_kernel,
        out_shape=jax.ShapeDtypeStruct((1, Np), jnp.float32),
        grid=grid,
        in_specs=[
            pl.BlockSpec((C, tk), lambda j, k: (0, k)),                   # xT src tile
            pl.BlockSpec((C, tn), lambda j, k: (0, j)),                   # xT dst tile
            pl.BlockSpec((C, 1), lambda j, k: (0, 0)),                    # w_rel (resident)
            pl.BlockSpec((C, 1), lambda j, k: (0, 0)),                    # w_root (resident)
            pl.BlockSpec((1, 1), lambda j, k: (0, 0), memory_space=pltpu.SMEM),  # bias
            pl.BlockSpec((tk, tn), lambda j, k: (k, j)),                  # adjT int8 stream
        ],
        out_specs=pl.BlockSpec((1, tn), lambda j, k: (0, j)),
        scratch_shapes=[pltpu.VMEM((SUB, tn), jnp.float32)],
        compiler_params=pltpu.CompilerParams(
            dimension_semantics=("parallel", "arbitrary"),
            vmem_limit_bytes=48 * 1024 * 1024),   # <= v7x 64 MiB; ample for int8 tiles
        cost_estimate=cost,
    )(xT, xT, w_rel, w_root, b2d, adjT)
    return score


# --------------------------------- forward --------------------------------- #
def sag_pooling_forward(x, edge_index, w_rel, b_rel, w_root,
                        ratio=0.5, multiplier=1.0, batch=None):
    """SAGPooling forward: score = tanh(A @ (x @ w_rel) + b_rel + x @ w_root),
    then device-side top-k, gather and scale.  Only filter_adj (dynamic number of
    surviving edges) is host-side index glue."""
    x = jnp.asarray(x, jnp.float32)
    N, C = x.shape
    src = jnp.asarray(edge_index[0], dtype=jnp.int32)
    dst = jnp.asarray(edge_index[1], dtype=jnp.int32)
    if batch is None:
        batch = jnp.zeros((N,), dtype=jnp.int32)
    # TODO(synk): single-graph only (batch all zeros); batched per-graph top-k and the
    # min_score/softmax scoring path are not implemented.

    Np = _round_up(N, 128)

    # Transposed adjacency adjT[src, dst] = edge multiplicity, scatter-added directly
    # into an int8 buffer (no dense f32 intermediate; exact for up to 127 parallel edges).
    # TODO(synk): for large sparse graphs switch to a CSR + scalar-prefetch formulation
    # instead of a dense O(N^2) adjacency.
    adjT = jnp.zeros((Np, Np), jnp.int8).at[src, dst].add(
        jnp.ones(src.shape, jnp.int8))

    # channel-major (node-on-lanes) copy of x, zero padded.
    xT = jnp.zeros((C, Np), jnp.float32).at[:, :N].set(x.T)

    score = sag_scores_pallas(adjT, xT, w_rel, w_root, b_rel)[0, :N]   # [N]

    # top-k on device; scale only the k selected rows.
    k = int(math.ceil(ratio * N))
    top_scores, perm = jax.lax.top_k(score, k)
    x_out = x[perm] * top_scores[:, None]
    if multiplier != 1.0:
        x_out = multiplier * x_out
    batch_out = batch[perm]

    # filter_adj: dynamic number of surviving edges -> host-side index glue
    # (forces a device sync; not jit-compatible by design).
    perm_np = np.asarray(perm)
    src_np = np.asarray(src)
    dst_np = np.asarray(dst)
    mapping = -np.ones((N,), dtype=np.int64)
    mapping[perm_np] = np.arange(k)
    keep = (mapping[src_np] >= 0) & (mapping[dst_np] >= 0)
    edge_index_out = np.stack([mapping[src_np[keep]], mapping[dst_np[keep]]], axis=0)
    edge_attr_out = None  # TODO(synk): edge_attr filtering not exercised in this setup

    return x_out, edge_index_out, edge_attr_out, batch_out, perm, top_scores


# ----------------------------------- demo ----------------------------------- #
if __name__ == "__main__":
    key = jax.random.PRNGKey(0)
    N, C = 16, 8                      # 16 nodes, in_channels = 8
    k1, k2, k3, k4 = jax.random.split(key, 4)

    x = jax.random.normal(k1, (N, C), dtype=jnp.float32)

    # deterministic edge set: bidirectional ring + a few chords
    src = list(range(N)) + [(i + 1) % N for i in range(N)] + [0, 3, 7, 12]
    dst = [(i + 1) % N for i in range(N)] + list(range(N)) + [8, 11, 2, 5]
    edge_index = np.stack([np.array(src, dtype=np.int32),
                           np.array(dst, dtype=np.int32)], axis=0)

    # GraphConv(in_channels, 1) params: lin_rel (with bias), lin_root (no bias)
    w_rel = jax.random.normal(k2, (C, 1), dtype=jnp.float32) * 0.3
    w_root = jax.random.normal(k3, (C, 1), dtype=jnp.float32) * 0.3
    b_rel = jax.random.normal(k4, (1, 1), dtype=jnp.float32) * 0.1

    out = sag_pooling_forward(x, edge_index, w_rel, b_rel, w_root,
                              ratio=0.5, multiplier=1.0)
    x_out, ei_out, ea_out, batch_out, perm, score_perm = out
    jax.block_until_ready((x_out, perm, score_perm))

    # --- correctness: kernel scores vs pure-JAX f32 reference ---
    adj = np.zeros((N, N), dtype=np.float32)
    np.add.at(adj, (edge_index[1], edge_index[0]), 1.0)       # adj[dst, src] += 1
    adj = jnp.asarray(adj)
    s_ref = jnp.tanh(adj @ (x @ w_rel) + b_rel[0, 0] + x @ w_root).reshape(-1)

    Np = _round_up(N, 128)
    adjT_pad = jnp.zeros((Np, Np), jnp.int8).at[
        jnp.asarray(edge_index[0]), jnp.asarray(edge_index[1])].add(
        jnp.ones((edge_index.shape[1],), jnp.int8))
    xT_pad = jnp.zeros((C, Np), jnp.float32).at[:, :N].set(x.T)
    s_ker = sag_scores_pallas(adjT_pad, xT_pad, w_rel, w_root, b_rel)[0, :N]
    # y_rel flows through bf16 on the MXU -> ~2^-9 relative rounding before tanh,
    # so the tolerance is loosened accordingly.
    np.testing.assert_allclose(np.asarray(s_ker), np.asarray(s_ref),
                               rtol=2e-2, atol=2e-3)

    # --- correctness: pooled output vs top-k/gather/scale of the kernel scores ---
    kk = int(math.ceil(0.5 * N))
    top_ck, perm_ck = jax.lax.top_k(s_ker, kk)
    x_ck = x[perm_ck] * top_ck[:, None]
    np.testing.assert_allclose(np.asarray(score_perm), np.asarray(top_ck),
                               rtol=1e-6, atol=1e-6)
    np.testing.assert_allclose(np.asarray(x_out), np.asarray(x_ck),
                               rtol=1e-6, atol=1e-6)
    assert x_out.shape == (kk, C) and np.asarray(perm).shape == (kk,)

    print("KERNEL_OK")
</pallas_src>

<mosaic_0001>
module attributes {stable_mosaic.version = 11 : i64} {
  func.func @_sag_score_kernel(%arg0: i32, %arg1: i32, %arg2: memref<8x128xf32, #tpu.memory_space<vmem>>, %arg3: memref<8x128xf32, #tpu.memory_space<vmem>>, %arg4: memref<8x1xf32, #tpu.memory_space<vmem>>, %arg5: memref<8x1xf32, #tpu.memory_space<vmem>>, %arg6: memref<1x1xf32, #tpu.memory_space<smem>>, %arg7: memref<128x128xi8, #tpu.memory_space<vmem>>, %arg8: memref<1x128xf32, #tpu.memory_space<vmem>>, %arg9: memref<8x128xf32, #tpu.memory_space<vmem>>) attributes {dimension_semantics = [#tpu.dimension_semantics<parallel>, #tpu.dimension_semantics<arbitrary>], iteration_bounds = array<i64: 1, 1>, scalar_prefetch = 0 : i64, scratch_operands = 1 : i64, tpu.core_type = #tpu.core_type<tc>, window_params = [{transform_indices = @transform_0, window_bounds = array<i64: 8, 128>}, {transform_indices = @transform_1, window_bounds = array<i64: 8, 128>}, {pipeline_mode = #tpu.pipeline_mode<synchronous>, transform_indices = @transform_2, window_bounds = array<i64: 8, 1>}, {pipeline_mode = #tpu.pipeline_mode<synchronous>, transform_indices = @transform_3, window_bounds = array<i64: 8, 1>}, {transform_indices = @transform_4, window_bounds = array<i64: 1, 1>}, {transform_indices = @transform_5, window_bounds = array<i64: 128, 128>}, {transform_indices = @transform_6, window_bounds = array<i64: 1, 128>}]} {
    %c0_i32 = arith.constant 0 : i32
    %0 = arith.cmpi eq, %arg1, %c0_i32 : i32
    %1 = arith.extui %0 : i1 to i32
    %c0_i32_0 = arith.constant 0 : i32
    %2 = arith.cmpi ne, %1, %c0_i32_0 : i32
    scf.if %2 {
      %cst_13 = arith.constant 0.000000e+00 : f32
      %21 = vector.broadcast %cst_13 : f32 to vector<8x128xf32>
      %c0_14 = arith.constant 0 : index
      %c0_15 = arith.constant 0 : index
      %22 = vector.load %arg9[%c0_14, %c0_15] : memref<8x128xf32, #tpu.memory_space<vmem>>, vector<8x128xf32>
      tpu.vector_store %arg9[%c0_14, %c0_15], %21 {strides = array<i32>} : memref<8x128xf32, #tpu.memory_space<vmem>>, vector<8x128xf32>,
    } else {
    }
    %c0 = arith.constant 0 : index
    %c0_1 = arith.constant 0 : index
    %3 = vector.load %arg2[%c0, %c0_1] : memref<8x128xf32, #tpu.memory_space<vmem>>, vector<8x128xf32>
    %c0_2 = arith.constant 0 : index
    %c0_3 = arith.constant 0 : index
    %4 = vector.load %arg4[%c0_2, %c0_3] : memref<8x1xf32, #tpu.memory_space<vmem>>, vector<8x1xf32>
    %5 = vector.broadcast %4 : vector<8x1xf32> to vector<8x128xf32>
    %6 = arith.mulf %3, %5 : vector<8x128xf32>
    %cst = arith.constant dense<0.000000e+00> : vector<128xf32>
    %7 = vector.multi_reduction <add>, %6, %cst [0] : vector<8x128xf32> to vector<128xf32>
    %8 = vector.shape_cast %7 : vector<128xf32> to vector<1x128xf32>
    %9 = arith.truncf %8 : vector<1x128xf32> to vector<1x128xbf16>
    %10 = vector.shape_cast %9 : vector<1x128xbf16> to vector<1x128xbf16>
    %11 = vector.broadcast %10 : vector<1x128xbf16> to vector<8x128xbf16>
    %c0_4 = arith.constant 0 : index
    %c0_5 = arith.constant 0 : index
    %12 = vector.load %arg7[%c0_4, %c0_5] : memref<128x128xi8, #tpu.memory_space<vmem>>, vector<128x128xi8>
    %13 = arith.sitofp %12 : vector<128x128xi8> to vector<128x128xbf16>
    %c0_6 = arith.constant 0 : index
    %c0_7 = arith.constant 0 : index
    %14 = vector.load %arg9[%c0_6, %c0_7] : memref<8x128xf32, #tpu.memory_space<vmem>>, vector<8x128xf32>
    %cst_8 = arith.constant dense<0.000000e+00> : vector<8x128xf32>
    %15 = tpu.matmul %11, %13, %cst_8 {dimension_numbers = #tpu.dot_dimension_numbers<[1], [0], [0], [1], [0, 0, 1, 1], [], []>} : vector<8x128xbf16>, vector<128x128xbf16>, vector<8x128xf32> -> vector<8x128xf32>
    %16 = arith.addf %14, %15 : vector<8x128xf32>
    %c0_9 = arith.constant 0 : index
    %c0_10 = arith.constant 0 : index
    %17 = vector.load %arg9[%c0_9, %c0_10] : memref<8x128xf32, #tpu.memory_space<vmem>>, vector<8x128xf32>
    tpu.vector_store %arg9[%c0_9, %c0_10], %16 {strides = array<i32>} : memref<8x128xf32, #tpu.memory_space<vmem>>, vector<8x128xf32>,
    %c0_i32_11 = arith.constant 0 : i32
    %18 = arith.cmpi eq, %arg1, %c0_i32_11 : i32
    %19 = arith.extui %18 : i1 to i32
    %c0_i32_12 = arith.constant 0 : i32
    %20 = arith.cmpi ne, %19, %c0_i32_12 : i32
    scf.if %20 {
      %c0_13 = arith.constant 0 : index
      %c0_14 = arith.constant 0 : index
      %21 = vector.load %arg3[%c0_13, %c0_14] : memref<8x128xf32, #tpu.memory_space<vmem>>, vector<8x128xf32>
      %c0_15 = arith.constant 0 : index
      %c0_16 = arith.constant 0 : index
      %22 = vector.load %arg5[%c0_15, %c0_16] : memref<8x1xf32, #tpu.memory_space<vmem>>, vector<8x1xf32>
      %23 = vector.broadcast %22 : vector<8x1xf32> to vector<8x128xf32>
      %24 = arith.mulf %21, %23 : vector<8x128xf32>
      %cst_17 = arith.constant dense<0.000000e+00> : vector<128xf32>
      %25 = vector.multi_reduction <add>, %24, %cst_17 [0] : vector<8x128xf32> to vector<128xf32>
      %26 = vector.shape_cast %25 : vector<128xf32> to vector<1x128xf32>
      %c0_18 = arith.constant 0 : index
      %c0_19 = arith.constant 0 : index
      %27 = vector.load %arg9[%c0_18, %c0_19] : memref<8x128xf32, #tpu.memory_space<vmem>>, vector<1x128xf32>
      %28 = arith.addf %27, %26 : vector<1x128xf32>
      %c0_20 = arith.constant 0 : index
      %c0_21 = arith.constant 0 : index
      %29 = memref.load %arg6[%c0_20, %c0_21] : memref<1x1xf32, #tpu.memory_space<smem>>
      %30 = vector.broadcast %29 : f32 to vector<1x128xf32>
      %31 = arith.addf %28, %30 : vector<1x128xf32>
      %32 = math.tanh %31 : vector<1x128xf32>
      %c0_22 = arith.constant 0 : index
      %c0_23 = arith.constant 0 : index
      %33 = vector.load %arg8[%c0_22, %c0_23] : memref<1x128xf32, #tpu.memory_space<vmem>>, vector<1x128xf32>
      tpu.vector_store %arg8[%c0_22, %c0_23], %32 {strides = array<i32>} : memref<1x128xf32, #tpu.memory_space<vmem>>, vector<1x128xf32>,
    } else {
    }
    return
  }
  func.func @transform_0(%arg0: i32, %arg1: i32) -> (i32, i32) {
    %c0_i32 = arith.constant 0 : i32
    %c0_i32_0 = arith.constant 0 : i32
    return %c0_i32, %arg1 : i32, i32
  }
  func.func @transform_1(%arg0: i32, %arg1: i32) -> (i32, i32) {
    %c0_i32 = arith.constant 0 : i32
    %c0_i32_0 = arith.constant 0 : i32
    return %c0_i32, %arg0 : i32, i32
  }
  func.func @transform_2(%arg0: i32, %arg1: i32) -> (i32, i32) {
    %c0_i32 = arith.constant 0 : i32
    %c0_i32_0 = arith.constant 0 : i32
    %c0_i32_1 = arith.constant 0 : i32
    return %c0_i32, %c0_i32_0 : i32, i32
  }
  func.func @transform_3(%arg0: i32, %arg1: i32) -> (i32, i32) {
    %c0_i32 = arith.constant 0 : i32
    %c0_i32_0 = arith.constant 0 : i32
    %c0_i32_1 = arith.constant 0 : i32
    return %c0_i32, %c0_i32_0 : i32, i32
  }
  func.func @transform_4(%arg0: i32, %arg1: i32) -> (i32, i32) {
    %c0_i32 = arith.constant 0 : i32
    %c0_i32_0 = arith.constant 0 : i32
    %c0_i32_1 = arith.constant 0 : i32
    return %c0_i32, %c0_i32_0 : i32, i32
  }
  func.func @transform_5(%arg0: i32, %arg1: i32) -> (i32, i32) {
    %c0_i32 = arith.constant 0 : i32
    return %arg1, %arg0 : i32, i32
  }
  func.func @transform_6(%arg0: i32, %arg1: i32) -> (i32, i32) {
    %c0_i32 = arith.constant 0 : i32
    %c0_i32_0 = arith.constant 0 : i32
    return %c0_i32, %arg0 : i32, i32
  }
}

</mosaic_0001>

<llo_original>
// kernel: tpu_custom_call.1
$region0: #{tpu_custom_call.1}
  #allocation0 [shape = 'u32[]', space=smem, size = 0x4, offset = 0x4, fixed_abs, tag = 'smem constant byte address 0x4 - core index']
  #allocation1 [shape = 'u32[72,128]{1,0:T(1,128)}', space=vmem, size = 0x9000, scoped, tag = 'internal scratch']
  #allocation2 [shape = 'f32[8,128]{1,0:T(8,128)}', space=vmem, size = 0x1000, scoped, tag = 'scratch operand']
  #allocation3 [shape = 'f32[1,1]{1,0:T(1,128)S(6)}', space=smem, size = 0x200, scoped, tag = 'scoped memory for tpu_custom_call.1']
  %s0 = inlined_call_operand.vmem [shape: f32[8,128], index: 0, kind: input, shape index: {}]
  %s1 = inlined_call_operand.vmem [shape: f32[8,128], index: 1, kind: input, shape index: {}]
  %s2 = inlined_call_operand.vmem [shape: f32[8,1], index: 2, kind: input, shape index: {}]
  %s3 = inlined_call_operand.vmem [shape: f32[8,1], index: 3, kind: input, shape index: {}]
  %s4 = inlined_call_operand.<no memory space> [shape: f32[1,1], index: 4, kind: input, shape index: {}]
  %s5 = inlined_call_operand.hbm [shape: s8[128,128], index: 5, kind: input, shape index: {}]
  %s6 = inlined_call_operand.hbm [shape: f32[1,128], index: 6, kind: output, shape index: {}]
  %s7 = sld [smem:[#allocation0]]
  $region46: #{tpu_custom_call.1} parent=0
    _
  %s9 = ssub.s32 1, %s7
  %s10 = scalar_select 0, %s9, %s7
  %11 = sst [smem:[#allocation3]] %s4
  $region1: #{tpu_custom_call.1} parent=0
    #allocation4 [shape = 'u8[16384]{0}', space=vmem, size = 0x4000, scoped, tag = 'input window, operand 5, single buffered']
    #allocation5 [shape = 's32[1]{0}', space=sflag, size = 0x4, scoped, tag = 'scoped memory for tpu_custom_call.1']
    #allocation6 [shape = 's32[1]{0}', space=sflag, size = 0x4, scoped, tag = 'scoped memory for tpu_custom_call.1']
    #allocation7 [shape = 'u8[512]{0}', space=vmem, size = 0x400, scoped, tag = 'output window, operand 0, single buffered']
    %12 = vsyncpa [#allocation5], 0
    %13 = vsyncpa [#allocation6], 0
    // Predicated region
    $region2: #{tpu_custom_call.1} parent=1 // pred_check
      _
    $region3: #{tpu_custom_call.1} parent=1 // pred_check_branch
      %15 = sbr.rel (0) target = $region5
    $region4: #{tpu_custom_call.1} parent=1 // pred_region
      _
    $region5: #{tpu_custom_call.1} parent=1 // pred_fallthru
      _
    // Predicated region
    $region6: #{tpu_custom_call.1} parent=1 // pred_check
      _
    $region7: #{tpu_custom_call.1} parent=1 // pred_check_branch
      %17 = sbr.rel (0) target = $region9
    $region8: #{tpu_custom_call.1} parent=1 // pred_region
      _
    $region9: #{tpu_custom_call.1} parent=1 // pred_fallthru
      _
    // Predicated region
    $region10: #{tpu_custom_call.1} parent=1 // pred_check
      _
    $region11: #{tpu_custom_call.1} parent=1 // pred_check_branch
      %19 = sbr.rel (0) target = $region13
    $region12: #{tpu_custom_call.1} parent=1 // pred_region
      _
    $region13: #{tpu_custom_call.1} parent=1 // pred_fallthru
      _
    // Predicated region
    $region14: #{tpu_custom_call.1} parent=1 // pred_check
      _
    $region15: #{tpu_custom_call.1} parent=1 // pred_check_branch
      %21 = sbr.rel (0) target = $region17
    $region16: #{tpu_custom_call.1} parent=1 // pred_region
      _
    $region17: #{tpu_custom_call.1} parent=1 // pred_fallthru
      _
    // Predicated region
    $region18: #{tpu_custom_call.1} parent=1 // pred_check
      _
    $region19: #{tpu_custom_call.1} parent=1 // pred_check_branch
      %23 = sbr.rel (0) target = $region21
    $region20: #{tpu_custom_call.1} parent=1 // pred_region
      _
    $region21: #{tpu_custom_call.1} parent=1 // pred_fallthru
      _
    // Predicated region
    $region22: #{tpu_custom_call.1} parent=1 // pred_check
      _
    $region23: #{tpu_custom_call.1} parent=1 // pred_check_branch
      %25 = sbr.rel (0) target = $region25
    $region24: #{tpu_custom_call.1} parent=1 // pred_region
      %27 = vsyncadd [#allocation5], 0
      %s28 = sshll.u32 %s5, 4
      %s29 = int_to_ptr.hbm [resolvable:$true] %s28
      %s30 = sshll.u32 [#allocation4], 4
      %s31 = int_to_ptr.vmem [resolvable:$true] %s30
      %36 = dma.hbm_to_vmem [thread:$0]  %s29, 512, %s31, [#allocation5], 128, 128, 8
    $region25: #{tpu_custom_call.1} parent=1 // pred_fallthru
      _
    // Predicated region
    $region26: #{tpu_custom_call.1} parent=1 // pred_check
      _
    $region27: #{tpu_custom_call.1} parent=1 // pred_check_branch
      %38 = sbr.rel (0) target = $region29
    $region28: #{tpu_custom_call.1} parent=1 // pred_region
      %40 = dma.done [#allocation5], 512
    $region29: #{tpu_custom_call.1} parent=1 // pred_fallthru
      _
    %p41 = scmp.eq.s32.totalorder 0, 0
    // Predicated region
    $region30: #{tpu_custom_call.1} parent=1 // pred_check
      %p42 = pneg %p41
    $region31: #{tpu_custom_call.1} parent=1 // pred_check_branch
      %44 = sbr.rel (%p42) target = $region33
    $region32: #{tpu_custom_call.1} parent=1 // pred_region
      %45 = vst [vmem:[#allocation2] sm:$0xff] 0.0
    $region33: #{tpu_custom_call.1} parent=1 // pred_fallthru
      _
    %v46 = vld [vmem:[%s0] sm:$0xff]
    %v47 = vld [vmem:[%s2] sm:$0xff]
    %49 = vset.pattern.permute.xlu0 0
    %50 = vperm.xlu0 %49, %v47
    %v51 = vpop.permute.xlu0 %50
    %v53 = vmul.f32 %v46, %v51
    %v54 = vrot.slane %v53, 4
    %v55 = vadd.f32 %v53, %v54
    %v56 = vrot.slane %v55, 2
    %v57 = vadd.f32 %v55, %v56
    %v58 = vrot.slane %v57, 1
    %v59 = vadd.f32 %v57, %v58
    %v60 = vpack.c.bf16 %v59, %v59
    %v61 = vld [vmem:[#allocation4] sm:$0xff]
    %v62 = vld [vmem:[#allocation4 + $0x8] sm:$0xff]
    %v63 = vld [vmem:[#allocation4 + $0x10] sm:$0xff]
    %v64 = vld [vmem:[#allocation4 + $0x18] sm:$0xff]
    %v65 = vunpack.c.0.s8 %v61
    %v66 = vunpack.c.1.s8 %v61
    %v67 = vunpack.c.2.s8 %v61
    %v68 = vunpack.c.3.s8 %v61
    %v69 = vunpack.c.0.s8 %v62
    %v70 = vunpack.c.1.s8 %v62
    %v71 = vunpack.c.2.s8 %v62
    %v72 = vunpack.c.3.s8 %v62
    %v73 = vunpack.c.0.s8 %v63
    %v74 = vunpack.c.1.s8 %v63
    %v75 = vunpack.c.2.s8 %v63
    %v76 = vunpack.c.3.s8 %v63
    %v77 = vunpack.c.0.s8 %v64
    %v78 = vunpack.c.1.s8 %v64
    %v79 = vunpack.c.2.s8 %v64
    %v80 = vunpack.c.3.s8 %v64
    %v81 = vcvt.s32.f32 %v65
    %v82 = vcvt.s32.f32 %v66
    %v83 = vcvt.s32.f32 %v67
    %v84 = vcvt.s32.f32 %v68
    %v85 = vcvt.s32.f32 %v69
    %v86 = vcvt.s32.f32 %v70
    %v87 = vcvt.s32.f32 %v71
    %v88 = vcvt.s32.f32 %v72
    %v89 = vcvt.s32.f32 %v73
    %v90 = vcvt.s32.f32 %v74
    %v91 = vcvt.s32.f32 %v75
    %v92 = vcvt.s32.f32 %v76
    %v93 = vcvt.s32.f32 %v77
    %v94 = vcvt.s32.f32 %v78
    %v95 = vcvt.s32.f32 %v79
    %v96 = vcvt.s32.f32 %v80
    %v97 = vpack.c.bf16 %v82, %v81
    %v98 = vpack.c.bf16 %v84, %v83
    %v99 = vpack.c.bf16 %v86, %v85
    %v100 = vpack.c.bf16 %v88, %v87
    %v101 = vpack.c.bf16 %v90, %v89
    %v102 = vpack.c.bf16 %v92, %v91
    %v103 = vpack.c.bf16 %v94, %v93
    %v104 = vpack.c.bf16 %v96, %v95
    %v105 = vld [vmem:[#allocation2] sm:$0xff]
    %106 = vmatpush.bf16.msra.mxu0 %v104
    %107 = vmatpush.bf16.msra.mxu0 %v103
    %108 = vmatpush.bf16.msra.mxu0 %v102
    %109 = vmatpush.bf16.msra.mxu0 %v101
    %110 = vmatpush.bf16.msra.mxu0 %v100
    %111 = vmatpush.bf16.msra.mxu0 %v99
    %112 = vmatpush.bf16.msra.mxu0 %v98
    %113 = vmatpush.bf16.msra.mxu0 %v97
    %114 = vmatmul.bf16.gmra.mxu0 %v60
    %v115 = vpop.f32.mrf.mxu0
    %v116 = vadd.f32 0.0, %v115
    %v117 = vpop.f32.mrf.mxu0
    %118 = vdwg.mxu0
    %v119 = vadd.f32 %v105, %v116
    %120 = vst [vmem:[#allocation2] sm:$0xff] %v119
    // Predicated region
    $region34: #{tpu_custom_call.1} parent=1 // pred_check
      %p121 = pneg %p41
    $region35: #{tpu_custom_call.1} parent=1 // pred_check_branch
      %123 = sbr.rel (%p121) target = $region37
    $region36: #{tpu_custom_call.1} parent=1 // pred_region
      %v124 = vld [vmem:[%s1] sm:$0xff]
      %v125 = vld [vmem:[%s3] sm:$0xff]
      %127 = vset.pattern.permute.xlu0 0
      %128 = vperm.xlu0 %127, %v125
      %v129 = vpop.permute.xlu0 %128
      %v131 = vmul.f32 %v124, %v129
      %v132 = vrot.slane %v131, 4
      %v133 = vadd.f32 %v131, %v132
      %v134 = vrot.slane %v133, 2
      %v135 = vadd.f32 %v133, %v134
      %v136 = vrot.slane %v135, 1
      %v137 = vadd.f32 %v135, %v136
      %v138 = vld [vmem:[#allocation2] sm:$0x1]
      %v139 = vadd.f32 %v138, %v137
      %s140 = sld [smem:[#allocation3]]
      %v141 = vstv %s140
      %v142 = vadd.f32 %v139, %v141
      %v143 = vtanh.pop %v142
      %144 = vst [vmem:[#allocation7] sm:$0x1] %v143
    $region37: #{tpu_custom_call.1} parent=1 // pred_fallthru
      _
    // Predicated region
    $region38: #{tpu_custom_call.1} parent=1 // pred_check
      _
    $region39: #{tpu_custom_call.1} parent=1 // pred_check_branch
      %146 = sbr.rel (0) target = $region41
    $region40: #{tpu_custom_call.1} parent=1 // pred_region
      %148 = vsyncadd [#allocation6], 0
      %s150 = sshll.u32 [#allocation7], 4
      %s151 = int_to_ptr.vmem [resolvable:$true] %s150
      %s152 = sshll.u32 %s6, 4
      %s153 = int_to_ptr.hbm [resolvable:$true] %s152
      %155 = dma.vmem_to_hbm [thread:$0]  %s151, 16, %s153, [#allocation6]
    $region41: #{tpu_custom_call.1} parent=1 // pred_fallthru
      _
    // Predicated region
    $region42: #{tpu_custom_call.1} parent=1 // pred_check
      _
    $region43: #{tpu_custom_call.1} parent=1 // pred_check_branch
      %157 = sbr.rel (0) target = $region45
    $region44: #{tpu_custom_call.1} parent=1 // pred_region
      %159 = dma.done [#allocation6], 16
    $region45: #{tpu_custom_call.1} parent=1 // pred_fallthru
      _
    %160 = vsyncpa [#allocation5], 1
    %161 = vsyncpa [#allocation6], 1

</llo_original>
